<compile_context>
chip_gen: v7x
topology: tpu7x:2x2x1
jax: 0.10.0
libtpu: 0.0.40
codegen_flags: <defaults>
</compile_context>

<pallas_src>
import math

import jax
import jax.numpy as jnp
from jax.experimental import pallas as pl
from jax.experimental.pallas import tpu as pltpu

LANE = 128
_TARGET_TILE_BYTES = 4 << 20   # ~4 MiB x-tile: safe on v7x (64 MiB VMEM), near-roofline on v5e/v6e
_MAX_FOLD_LANES = 8192         # cap on the folded row width W = lcm(C, 128)


def _cdiv(a, b):
    return (a + b - 1) // b


def _round_up(a, b):
    return _cdiv(a, b) * b


def _sublane(dtype):
    # sublane packing multiple for the second-to-last block dim
    return {4: 8, 2: 16, 1: 32}.get(jnp.dtype(dtype).itemsize, 8)


def _scaler_kernel(x_ref, w_ref, b_ref, o_ref):
    # Elementwise affine: y = w * x + b, w/b (1, W) rows broadcast over the tile.
    # Pure VPU work, fully hidden under the HBM stream.
    o_ref[...] = (w_ref[...] * x_ref[...] + b_ref[...]).astype(o_ref.dtype)


def _scaler_call(x2d, w_row, b_row, tile_rows, out_dtype):
    """x2d: (M, W); w_row/b_row: (1, W).  Ragged 1-D grid over rows (no padding)."""
    M, W = x2d.shape
    grid = (_cdiv(M, tile_rows),)
    return pl.pallas_call(
        _scaler_kernel,
        out_shape=jax.ShapeDtypeStruct((M, W), out_dtype),
        grid_spec=pltpu.PrefetchScalarGridSpec(
            num_scalar_prefetch=0,
            grid=grid,
            in_specs=[
                pl.BlockSpec((tile_rows, W), lambda i: (i, 0)),
                # weight / bias: constant block index -> DMA'd once, revisited for free.
                pl.BlockSpec((1, W), lambda i: (0, 0)),
                pl.BlockSpec((1, W), lambda i: (0, 0)),
            ],
            out_specs=pl.BlockSpec((tile_rows, W), lambda i: (i, 0)),
        ),
        compiler_params=pltpu.CompilerParams(
            dimension_semantics=("parallel",),
            vmem_limit_bytes=32 << 20,
        ),
    )(x2d, w_row, b_row)


def _pick_tile_rows(M, width, itemsize, sub):
    """Row-tile height: sublane-aligned, ~4 MiB budget, >= 2 grid steps when possible."""
    if M <= sub:
        return M  # block dim equals the full array dim -> always legal, grid = 1
    tile = (_TARGET_TILE_BYTES // (width * itemsize)) // sub * sub
    tile = max(sub, tile)
    # v7x megacore: keep at least 2 row-grid steps so both TensorCores get work
    # (no effect on v5e/v6e, which have a single TC).
    tile = min(tile, max(sub, _round_up(_cdiv(M, 2), sub)))
    tile = min(tile, _round_up(M, sub))
    return tile


def scaler_forward(x, weight, bias):
    """Pallas implementation of Scaler.forward.

    x:      (..., C) float array (channels last)
    weight: (C,)     float array
    bias:   (C,)     float array
    """
    orig_shape = x.shape
    C = orig_shape[-1]
    out_dtype = jnp.result_type(x.dtype, weight.dtype, bias.dtype)
    itemsize = jnp.dtype(x.dtype).itemsize
    sub = _sublane(x.dtype)

    x2 = x.reshape(-1, C)
    N = x2.shape[0]
    total = N * C

    # ---- Lane-folding path: when C is not lane-dense, fold whole logical rows
    # into a W = lcm(C, 128) wide slab so every vector store is a full 128-lane
    # vst (matters most on v5e's single store slot).  Only taken when the fold
    # needs NO padding (total % W == 0) -- padding/slicing would cost two extra
    # full-array HBM passes, more than the masked stores it would avoid.
    if C % LANE != 0:
        W = C * (LANE // math.gcd(C, LANE))   # lcm(C, 128)
        if W <= _MAX_FOLD_LANES and total % W == 0:
            M = total // W
            xf = x2.reshape(M, W)
            wf = jnp.tile(weight, W // C).reshape(1, W)   # channel pattern repeats per row
            bf = jnp.tile(bias, W // C).reshape(1, W)
            tile_rows = _pick_tile_rows(M, W, itemsize, sub)
            yf = _scaler_call(xf, wf, bf, tile_rows, out_dtype)
            return yf.reshape(orig_shape)

    # ---- Direct path: block width == full C (single contiguous DMA per row-slab;
    # lane-dense whenever C % 128 == 0, full-array-dim block otherwise).  Ragged
    # row grid -> no jnp.pad and no output slice.
    tile_rows = _pick_tile_rows(N, C, itemsize, sub)
    y = _scaler_call(x2, weight.reshape(1, C), bias.reshape(1, C), tile_rows, out_dtype)
    return y.reshape(orig_shape)


if __name__ == "__main__":
    key = jax.random.PRNGKey(0)
    # Small shapes consistent with the module (channels-last broadcast of (C,) params).
    tests = [
        ("4d lane-fold  C=16 -> W=128", (2, 4, 16, 16)),
        ("lane-dense C, ragged rows", (13, 256)),
        ("odd-C fold    C=48 -> W=384", (8, 48)),
        ("odd-C direct ragged fallback", (7, 48)),
        ("small-C fold  C=32 -> W=128", (8, 32)),
    ]
    for idx, (name, shape) in enumerate(tests):
        c = shape[-1]
        kx, kw, kb = jax.random.split(jax.random.fold_in(key, idx), 3)
        # Scaler(ref_center) init -> weight = ones(C), bias = zeros(C) with
        # C = ref_center.shape[1]. Perturb slightly (parameters are trainable)
        # so the affine transform is non-trivial but deterministic.
        ref_center = jnp.zeros((4, c), jnp.float32)
        weight = jnp.ones((ref_center.shape[1],), jnp.float32) \
            + 0.1 * jax.random.normal(kw, (c,), jnp.float32)
        bias = jnp.zeros((ref_center.shape[1],), jnp.float32) \
            + 0.1 * jax.random.normal(kb, (c,), jnp.float32)
        x = jax.random.normal(kx, shape, dtype=jnp.float32)

        y = scaler_forward(x, weight, bias)
        jax.block_until_ready(y)

        y_ref = weight * x + bias  # PyTorch broadcasting semantics
        assert y.shape == y_ref.shape, f"shape mismatch in {name}"
        assert jnp.allclose(y, y_ref, atol=1e-5, rtol=1e-5), f"mismatch in {name}"

    print("KERNEL_OK")
</pallas_src>

<mosaic_0001>
module attributes {stable_mosaic.version = 11 : i64} {
  func.func @_scaler_kernel(%arg0: i32, %arg1: memref<8x128xf32, #tpu.memory_space<vmem>>, %arg2: memref<1x128xf32, #tpu.memory_space<vmem>>, %arg3: memref<1x128xf32, #tpu.memory_space<vmem>>, %arg4: memref<8x128xf32, #tpu.memory_space<vmem>>) attributes {dimension_semantics = [#tpu.dimension_semantics<parallel>], iteration_bounds = array<i64: 2>, scalar_prefetch = 0 : i64, scratch_operands = 0 : i64, tpu.core_type = #tpu.core_type<tc>, window_params = [{transform_indices = @transform_0, window_bounds = array<i64: 8, 128>}, {pipeline_mode = #tpu.pipeline_mode<synchronous>, transform_indices = @transform_1, window_bounds = array<i64: 1, 128>}, {pipeline_mode = #tpu.pipeline_mode<synchronous>, transform_indices = @transform_2, window_bounds = array<i64: 1, 128>}, {transform_indices = @transform_3, window_bounds = array<i64: 8, 128>}]} {
    %c0 = arith.constant 0 : index
    %c0_0 = arith.constant 0 : index
    %0 = vector.load %arg2[%c0, %c0_0] : memref<1x128xf32, #tpu.memory_space<vmem>>, vector<1x128xf32>
    %c0_1 = arith.constant 0 : index
    %c0_2 = arith.constant 0 : index
    %1 = vector.load %arg1[%c0_1, %c0_2] : memref<8x128xf32, #tpu.memory_space<vmem>>, vector<8x128xf32>
    %2 = vector.broadcast %0 : vector<1x128xf32> to vector<8x128xf32>
    %3 = arith.mulf %2, %1 : vector<8x128xf32>
    %c0_3 = arith.constant 0 : index
    %c0_4 = arith.constant 0 : index
    %4 = vector.load %arg3[%c0_3, %c0_4] : memref<1x128xf32, #tpu.memory_space<vmem>>, vector<1x128xf32>
    %5 = vector.broadcast %4 : vector<1x128xf32> to vector<8x128xf32>
    %6 = arith.addf %3, %5 : vector<8x128xf32>
    %c0_5 = arith.constant 0 : index
    %c0_6 = arith.constant 0 : index
    %7 = vector.load %arg4[%c0_5, %c0_6] : memref<8x128xf32, #tpu.memory_space<vmem>>, vector<8x128xf32>
    tpu.vector_store %arg4[%c0_5, %c0_6], %6 {strides = array<i32>} : memref<8x128xf32, #tpu.memory_space<vmem>>, vector<8x128xf32>,
    return
  }
  func.func @transform_0(%arg0: i32) -> (i32, i32) {
    %c0_i32 = arith.constant 0 : i32
    %c0_i32_0 = arith.constant 0 : i32
    return %arg0, %c0_i32 : i32, i32
  }
  func.func @transform_1(%arg0: i32) -> (i32, i32) {
    %c0_i32 = arith.constant 0 : i32
    %c0_i32_0 = arith.constant 0 : i32
    %c0_i32_1 = arith.constant 0 : i32
    return %c0_i32, %c0_i32_0 : i32, i32
  }
  func.func @transform_2(%arg0: i32) -> (i32, i32) {
    %c0_i32 = arith.constant 0 : i32
    %c0_i32_0 = arith.constant 0 : i32
    %c0_i32_1 = arith.constant 0 : i32
    return %c0_i32, %c0_i32_0 : i32, i32
  }
  func.func @transform_3(%arg0: i32) -> (i32, i32) {
    %c0_i32 = arith.constant 0 : i32
    %c0_i32_0 = arith.constant 0 : i32
    return %arg0, %c0_i32 : i32, i32
  }
}

</mosaic_0001>

<llo_original>
// kernel: tpu_custom_call.1
$region0: #{tpu_custom_call.1}
  #allocation0 [shape = 'u32[]', space=smem, size = 0x4, offset = 0x4, fixed_abs, tag = 'smem constant byte address 0x4 - core index']
  #allocation1 [shape = 'u32[144,128]{1,0:T(1,128)}', space=vmem, size = 0x12000, scoped, tag = 'internal scratch']
  %s0 = inlined_call_operand.hbm [shape: f32[16,128], index: 0, kind: input, shape index: {}]
  %s1 = inlined_call_operand.vmem [shape: f32[1,128], index: 1, kind: input, shape index: {}]
  %s2 = inlined_call_operand.vmem [shape: f32[1,128], index: 2, kind: input, shape index: {}]
  %s3 = inlined_call_operand.hbm [shape: f32[16,128], index: 3, kind: output, shape index: {}]
  %s4 = sld [smem:[#allocation0]]
  $region49: #{tpu_custom_call.1} parent=0
    _
  %s6 = ssub.s32 1, %s4
  %s7 = scalar_select 0, %s6, %s4
  $region1: #{tpu_custom_call.1} parent=0
    #allocation2 [shape = 'u8[8192]{0}', space=vmem, size = 0x2000, scoped, tag = 'input window, operand 0']
    #allocation3 [shape = 's32[2]{0}', space=sflag, size = 0x8, scoped, tag = 'scoped memory for tpu_custom_call.1']
    #allocation4 [shape = 's32[2]{0}', space=sflag, size = 0x8, scoped, tag = 'scoped memory for tpu_custom_call.1']
    #allocation5 [shape = 'u8[8192]{0}', space=vmem, size = 0x2000, scoped, tag = 'output window, operand 0']
    %8 = vsyncpa [#allocation3], 0
    %s9 = scalar_lea.sflag [#allocation3], 1
    %10 = vsyncpa %s9, 0
    %11 = vsyncpa [#allocation4], 0
    %s12 = scalar_lea.sflag [#allocation4], 1
    %13 = vsyncpa %s12, 0
    loop: start=0, step=1, limit=4
    $region2: #{tpu_custom_call.1} parent=1 // loop_pre_header
      _
    $region3: #{tpu_custom_call.1} parent=1 // loop_header
      %s15 = sphi 0, %s19
      %p16 = scmp.ge.s32.totalorder %s15, 4
      %s25 = sphi 0, %s27
      %s28 = sphi 0, %s25
      %s29 = sphi 0, %s28
      %s45 = sphi 0, %s29
      %s49 = sphi 0, %s49
      %s51 = sphi 0, %s49
      %s52 = sphi 0, %s51
      %s66 = sphi 0, %s52
      %s70 = sphi 0, %s70
      %s72 = sphi 0, %s70
      %s73 = sphi 0, %s72
      %s87 = sphi 0, %s73
      %s93 = sphi 0, %s95
      %s96 = sphi 0, %s93
      %s97 = sphi 0, %s96
      %s113 = sphi 0, %s97
    $region4: #{tpu_custom_call.1} parent=1 // loop_header_branch
      %18 = sbr.rel (%p16) target = $region8
    $region5: #{tpu_custom_call.1} parent=1 // loop_body
      %s20 = ssub.s32 %s15, 1
      %s21 = ssub.s32 %s15, 2
      %s22 = sadd.s32 %s15, 1
      %s23 = ssub.s32 %s15, %s22
      %p24 = scmp.eq.s32.totalorder %s23, 0
      %s26 = sadd.s32 %s25, 1
      %s27 = scalar_select %p24, %s25, %s26
      %p30 = pneg %p24
      %p31 = scmp.eq.s32.totalorder %s15, 1
      %p32 = por %p30, %p31
      %p33 = scmp.ne.s32.totalorder %s25, %s28
      %p34 = scmp.eq.s32.totalorder %s15, 0
      %p35 = por %p33, %p34
      %p36 = scmp.ne.s32.totalorder %s25, %s28
      %p37 = scmp.eq.s32.totalorder %s20, 1
      %p38 = por %p36, %p37
      %p39 = scmp.ne.s32.totalorder %s28, %s29
      %p40 = scmp.eq.s32.totalorder %s20, 0
      %p41 = por %p39, %p40
      %p42 = scmp.ne.s32.totalorder %s28, %s29
      %p43 = scmp.eq.s32.totalorder %s21, 1
      %p44 = por %p42, %p43
      %p46 = scmp.ne.s32.totalorder %s29, %s45
      %p47 = scmp.eq.s32.totalorder %s21, 0
      %p48 = por %p46, %p47
      %s50 = sadd.s32 %s49, 1
      %p53 = scmp.eq.s32.totalorder %s15, 1
      %p54 = scmp.ne.s32.totalorder %s49, %s51
      %p55 = scmp.eq.s32.totalorder %s15, 0
      %p56 = por %p54, %p55
      %p57 = scmp.ne.s32.totalorder %s49, %s51
      %p58 = scmp.eq.s32.totalorder %s20, 1
      %p59 = por %p57, %p58
      %p60 = scmp.ne.s32.totalorder %s51, %s52
      %p61 = scmp.eq.s32.totalorder %s20, 0
      %p62 = por %p60, %p61
      %p63 = scmp.ne.s32.totalorder %s51, %s52
      %p64 = scmp.eq.s32.totalorder %s21, 1
      %p65 = por %p63, %p64
      %p67 = scmp.ne.s32.totalorder %s52, %s66
      %p68 = scmp.eq.s32.totalorder %s21, 0
      %p69 = por %p67, %p68
      %s71 = sadd.s32 %s70, 1
      %p74 = scmp.eq.s32.totalorder %s15, 1
      %p75 = scmp.ne.s32.totalorder %s70, %s72
      %p76 = scmp.eq.s32.totalorder %s15, 0
      %p77 = por %p75, %p76
      %p78 = scmp.ne.s32.totalorder %s70, %s72
      %p79 = scmp.eq.s32.totalorder %s20, 1
      %p80 = por %p78, %p79
      %p81 = scmp.ne.s32.totalorder %s72, %s73
      %p82 = scmp.eq.s32.totalorder %s20, 0
      %p83 = por %p81, %p82
      %p84 = scmp.ne.s32.totalorder %s72, %s73
      %p85 = scmp.eq.s32.totalorder %s21, 1
      %p86 = por %p84, %p85
      %p88 = scmp.ne.s32.totalorder %s73, %s87
      %p89 = scmp.eq.s32.totalorder %s21, 0
      %p90 = por %p88, %p89
      %s91 = ssub.s32 %s15, %s22
      %p92 = scmp.eq.s32.totalorder %s91, 0
      %s94 = sadd.s32 %s93, 1
      %s95 = scalar_select %p92, %s93, %s94
      %p98 = pneg %p92
      %p99 = scmp.eq.s32.totalorder %s15, 1
      %p100 = por %p98, %p99
      %p101 = scmp.ne.s32.totalorder %s93, %s96
      %p102 = scmp.eq.s32.totalorder %s15, 0
      %p103 = por %p101, %p102
      %p104 = scmp.ne.s32.totalorder %s93, %s96
      %p105 = scmp.eq.s32.totalorder %s20, 1
      %p106 = por %p104, %p105
      %p107 = scmp.ne.s32.totalorder %s96, %s97
      %p108 = scmp.eq.s32.totalorder %s20, 0
      %p109 = por %p107, %p108
      %p110 = scmp.ne.s32.totalorder %s96, %s97
      %p111 = scmp.eq.s32.totalorder %s21, 1
      %p112 = por %p110, %p111
      %p114 = scmp.ne.s32.totalorder %s97, %s113
      %p115 = scmp.eq.s32.totalorder %s21, 0
      %p116 = por %p114, %p115
      %p117 = scmp.le.s32.totalorder 1, %s15
      %p118 = scmp.lt.s32.totalorder %s15, 3
      %p119 = pnand %p117, %p118
      %p120 = pneg %p119
      // Predicated region
      $region9: #{tpu_custom_call.1} parent=5 // pred_check
        _
      $region10: #{tpu_custom_call.1} parent=5 // pred_check_branch
        %122 = sbr.rel (%p119) target = $region12
      $region11: #{tpu_custom_call.1} parent=5 // pred_region
        %s123 = ssub.s32 %s15, 1
        // Predicated region
        $region13: #{tpu_custom_call.1} parent=11 // pred_check
          %p124 = pneg %p62
        $region14: #{tpu_custom_call.1} parent=11 // pred_check_branch
          %126 = sbr.rel (%p124) target = $region16
        $region15: #{tpu_custom_call.1} parent=11 // pred_region
          _
        $region16: #{tpu_custom_call.1} parent=11 // pred_fallthru
          _
        // Predicated region
        $region17: #{tpu_custom_call.1} parent=11 // pred_check
          %p127 = pneg %p83
        $region18: #{tpu_custom_call.1} parent=11 // pred_check_branch
          %129 = sbr.rel (%p127) target = $region20
        $region19: #{tpu_custom_call.1} parent=11 // pred_region
          _
        $region20: #{tpu_custom_call.1} parent=11 // pred_fallthru
          _
      $region12: #{tpu_custom_call.1} parent=5 // pred_fallthru
        _
      %p130 = scmp.lt.s32.totalorder %s15, 2
      // Predicated region
      $region21: #{tpu_custom_call.1} parent=5 // pred_check
        %p131 = pneg %p130
      $region22: #{tpu_custom_call.1} parent=5 // pred_check_branch
        %133 = sbr.rel (%p131) target = $region24
      $region23: #{tpu_custom_call.1} parent=5 // pred_region
        // Predicated region
        $region25: #{tpu_custom_call.1} parent=23 // pred_check
          %p134 = pneg %p35
        $region26: #{tpu_custom_call.1} parent=23 // pred_check_branch
          %136 = sbr.rel (%p134) target = $region28
        $region27: #{tpu_custom_call.1} parent=23 // pred_region
          %s137 = sand.u32 %s25, 1
          %s138 = scalar_lea.sflag [#allocation3], %s137
          %s139 = sand.u32 %s25, 1
          %s140 = smul.addr %s139, 8
          %s141 = scalar_lea.vmem [#allocation2], %s140
          %s143 = ssub.s32 128, 128
          %144 = vsyncadd %s138, %s143
          %s145 = smul.addr %s15, 128
          %s146 = scalar_lea.hbm %s0, %s145
          %s148 = sshll.u32 %s141, 4
          %s149 = int_to_ptr.vmem [resolvable:$true] %s148
          %151 = dma.hbm_to_vmem [thread:$0]  %s146, 128, %s149, %s138
        $region28: #{tpu_custom_call.1} parent=23 // pred_fallthru
          _
      $region24: #{tpu_custom_call.1} parent=5 // pred_fallthru
        _
      %p152 = scmp.le.s32.totalorder 1, %s15
      %p153 = scmp.lt.s32.totalorder %s15, 3
      %p154 = pnand %p152, %p153
      %p155 = pneg %p154
      // Predicated region
      $region29: #{tpu_custom_call.1} parent=5 // pred_check
        _
      $region30: #{tpu_custom_call.1} parent=5 // pred_check_branch
        %157 = sbr.rel (%p154) target = $region32
      $region31: #{tpu_custom_call.1} parent=5 // pred_region
        %s158 = ssub.s32 %s15, 1
        %s159 = sand.u32 %s28, 1
        %s160 = scalar_lea.sflag [#allocation3], %s159
        %s161 = sand.u32 %s28, 1
        %s162 = smul.addr %s161, 8
        %s163 = scalar_lea.vmem [#allocation2], %s162
        // Predicated region
        $region33: #{tpu_custom_call.1} parent=31 // pred_check
          %p164 = pneg %p41
        $region34: #{tpu_custom_call.1} parent=31 // pred_check_branch
          %166 = sbr.rel (%p164) target = $region36
        $region35: #{tpu_custom_call.1} parent=31 // pred_region
          %167 = dma.done %s160, 128
        $region36: #{tpu_custom_call.1} parent=31 // pred_fallthru
          _
        %s168 = sand.u32 %s28, 1
        %s169 = scalar_lea.sflag [#allocation3], %s168
        %s170 = sand.u32 %s28, 1
        %s171 = smul.addr %s170, 8
        %s172 = scalar_lea.vmem [#allocation2], %s171
        %p173 = pneg %p41
        %p174 = pneg %p38
        %p175 = pneg %p62
        %p176 = pneg %p59
        %p177 = pneg %p83
        %p178 = pneg %p80
        %p179 = pneg %p109
        %p180 = pneg %p106
        %s181 = sand.u32 %s96, 1
        %s182 = scalar_lea.sflag [#allocation4], %s181
        %s183 = sand.u32 %s96, 1
        %s184 = smul.addr %s183, 8
        %s185 = scalar_lea.vmem [#allocation5], %s184
        %v186 = vld [vmem:[%s1] sm:$0x1]
        %v187 = vld [vmem:[%s163] sm:$0xff]
        %v189 = vlaneseq
        %v190 = vshrl.u32 %v189, 7
        %v191 = vsub.s32 0, %v190
        %v192 = vrot.slane %v186, %v191
        %v194 = vmul.f32 %v192, %v187
        %v195 = vld [vmem:[%s2] sm:$0x1]
        %v197 = vlaneseq
        %v198 = vshrl.u32 %v197, 7
        %v199 = vsub.s32 0, %v198
        %v200 = vrot.slane %v195, %v199
        %v202 = vadd.f32 %v194, %v200
        %203 = vst [vmem:[%s185] sm:$0xff] %v202
        %s204 = sand.u32 %s96, 1
        %s205 = scalar_lea.sflag [#allocation4], %s204
        %s206 = sand.u32 %s96, 1
        %s207 = smul.addr %s206, 8
        %s208 = scalar_lea.vmem [#allocation5], %s207
        // Predicated region
        $region37: #{tpu_custom_call.1} parent=31 // pred_check
          %p209 = pneg %p106
        $region38: #{tpu_custom_call.1} parent=31 // pred_check_branch
          %211 = sbr.rel (%p209) target = $region40
        $region39: #{tpu_custom_call.1} parent=31 // pred_region
          %s213 = ssub.s32 128, 128
          %214 = vsyncadd %s205, %s213
          %s215 = smul.addr %s20, 128
          %s216 = scalar_lea.hbm %s3, %s215
          %s218 = sshll.u32 %s208, 4
          %s219 = int_to_ptr.vmem [resolvable:$true] %s218
          %221 = dma.vmem_to_hbm [thread:$0]  %s219, 128, %s216, %s205
        $region40: #{tpu_custom_call.1} parent=31 // pred_fallthru
          _
      $region32: #{tpu_custom_call.1} parent=5 // pred_fallthru
        _
      %p222 = scmp.le.s32.totalorder 2, %s15
      // Predicated region
      $region41: #{tpu_custom_call.1} parent=5 // pred_check
        %p223 = pneg %p222
      $region42: #{tpu_custom_call.1} parent=5 // pred_check_branch
        %225 = sbr.rel (%p223) target = $region44
      $region43: #{tpu_custom_call.1} parent=5 // pred_region
        %s226 = ssub.s32 %s15, 2
        // Predicated region
        $region45: #{tpu_custom_call.1} parent=43 // pred_check
          %p227 = pneg %p112
        $region46: #{tpu_custom_call.1} parent=43 // pred_check_branch
          %229 = sbr.rel (%p227) target = $region48
        $region47: #{tpu_custom_call.1} parent=43 // pred_region
          %s230 = sand.u32 %s97, 1
          %s231 = scalar_lea.sflag [#allocation4], %s230
          %s232 = sand.u32 %s97, 1
          %s233 = smul.addr %s232, 8
          %s234 = scalar_lea.vmem [#allocation5], %s233
          %235 = dma.done %s231, 128
        $region48: #{tpu_custom_call.1} parent=43 // pred_fallthru
          _
      $region44: #{tpu_custom_call.1} parent=5 // pred_fallthru
        _
    $region6: #{tpu_custom_call.1} parent=1 // loop_footer
      %s19 = sadd.s32 1, %s15
    $region7: #{tpu_custom_call.1} parent=1 // loop_footer_branch
      %14 = sbr.rel target = $region3
    $region8: #{tpu_custom_call.1} parent=1 // loop_exit
      _
    %236 = vsyncpa [#allocation3], 1
    %s237 = scalar_lea.sflag [#allocation3], 1
    %238 = vsyncpa %s237, 1
    %239 = vsyncpa [#allocation4], 1
    %s240 = scalar_lea.sflag [#allocation4], 1
    %241 = vsyncpa %s240, 1

</llo_original>
